<compile_context>
chip_gen: v7x
topology: tpu7x:2x2x1
jax: 0.10.0
libtpu: 0.0.40
codegen_flags: <defaults>
</compile_context>

<pallas_src>
import math

import jax
import jax.numpy as jnp
from jax.experimental import pallas as pl
from jax.experimental.pallas import tpu as pltpu


def interaction_kernel(u_ref, it_ref,
                       w1u_ref, w1i_ref, b1_ref,
                       w2_ref, b2_ref,
                       wf_ref, bf_ref,
                       out_ref):
    # Hidden layer 1: Linear(2D -> H1) with the lane-axis concat eliminated by
    # splitting w1 into user/item halves; BN (eval) is folded into w1/b1.
    hu = jnp.dot(u_ref[...], w1u_ref[...],
                 preferred_element_type=jnp.float32)           # [1 or T, H1]
    hi = jnp.dot(it_ref[...], w1i_ref[...],
                 preferred_element_type=jnp.float32)           # [T, H1]
    h = jnp.maximum(hi + hu + b1_ref[...], 0.0)                # broadcast user row

    # Hidden layer 2: Linear(H1 -> H2), BN folded, ReLU.
    h = jnp.dot(h.astype(w2_ref.dtype), w2_ref[...],
                preferred_element_type=jnp.float32) + b2_ref[...]
    h = jnp.maximum(h, 0.0)                                    # [T, H2]

    # Final Linear(H2 -> 1), activation 'none': VPU multiply + lane reduce
    # instead of a degenerate 1-output-column MXU matmul.
    out = jnp.sum(h * wf_ref[...], axis=-1, keepdims=True) + bf_ref[...]  # [T, 1]
    out_ref[...] = out


def interaction_recommender_forward(user_ids, item_ids, kparams, *, tile_n=1024):
    """Embedding lookup is glue; the MLP runs in one Pallas kernel, pipelined
    over batch tiles with weights resident in VMEM."""
    u = jnp.take(kparams["user_table"], user_ids, axis=0)      # [Bu, D]
    it = jnp.take(kparams["item_table"], item_ids, axis=0)     # [N, D]
    # TODO(synk): the item gather could move on-chip (scalar-prefetch ids +
    # manual DMA gather from an HBM-resident table); kept as XLA glue here.

    n, d = it.shape
    bu = u.shape[0]
    if bu != 1 and bu != n:
        raise ValueError("query_users batch must be 1 or match query_items batch")

    # Batch tiling (rows are the sublane axis -> keep tiles a multiple of 8).
    tile_n = max(8, min(int(tile_n), ((n + 7) // 8) * 8))
    tile_n = ((tile_n + 7) // 8) * 8
    n_pad = pl.cdiv(n, tile_n) * tile_n
    grid = (n_pad // tile_n,)

    it_p = jnp.pad(it, ((0, n_pad - n), (0, 0))).astype(jnp.bfloat16)

    if bu == 1:
        # Single query user: one [1, D] block, VMEM-resident, broadcast in-kernel.
        u_p = u.astype(jnp.bfloat16)
        u_spec = pl.BlockSpec((1, d), lambda i: (0, 0))
    else:
        u_p = jnp.pad(u, ((0, n_pad - n), (0, 0))).astype(jnp.bfloat16)
        u_spec = pl.BlockSpec((tile_n, d), lambda i: (i, 0))

    h1 = kparams["w1u"].shape[1]
    h2 = kparams["w2"].shape[1]

    def const(shape):  # weights/biases: same block every grid step -> stay resident
        return pl.BlockSpec(shape, lambda i: (0, 0))

    out = pl.pallas_call(
        interaction_kernel,
        out_shape=jax.ShapeDtypeStruct((n_pad, 1), jnp.float32),
        grid=grid,
        in_specs=[
            u_spec,
            pl.BlockSpec((tile_n, d), lambda i: (i, 0)),
            const((d, h1)), const((d, h1)), const((1, h1)),
            const((h1, h2)), const((1, h2)),
            const((1, h2)), const((1, 1)),
        ],
        out_specs=pl.BlockSpec((tile_n, 1), lambda i: (i, 0)),
        compiler_params=pltpu.CompilerParams(
            dimension_semantics=("parallel",),
        ),
    )(u_p, it_p,
      kparams["w1u"], kparams["w1i"], kparams["b1"],
      kparams["w2"], kparams["b2"],
      kparams["wf"], kparams["bf"])

    return out[:n, 0]                                          # .squeeze(1)


# ----------------------------------------------------------------------------
# Parameter construction (module-equivalent) and folding for the kernel.
# ----------------------------------------------------------------------------

def make_module_params(key, num_users, num_items, input_size, hidden_sizes,
                       final_size=1):
    """Parameters matching the torch module layout (f32, un-folded)."""
    D = input_size
    h1, h2 = hidden_sizes
    ks = jax.random.split(key, 8)

    def linear_init(k, fan_in, fan_out):
        bound = 1.0 / math.sqrt(fan_in)
        w = jax.random.uniform(k, (fan_in, fan_out), jnp.float32, -bound, bound)
        b = jnp.zeros((1, fan_out), jnp.float32)   # module: linear.bias.data.fill_(0.0)
        return w, b

    def bn_init(size):  # fresh BatchNorm1d running stats (eval mode)
        return dict(gamma=jnp.ones((1, size), jnp.float32),
                    beta=jnp.zeros((1, size), jnp.float32),
                    mean=jnp.zeros((1, size), jnp.float32),
                    var=jnp.ones((1, size), jnp.float32))

    w1, b1 = linear_init(ks[2], 2 * D, h1)
    w2, b2 = linear_init(ks[3], h1, h2)
    wf, bf = linear_init(ks[4], h2, final_size)

    return {
        "user_table": jax.random.normal(ks[0], (num_users, D), jnp.float32),
        "item_table": jax.random.normal(ks[1], (num_items, D), jnp.float32),
        "w1": w1, "b1": b1, "bn1": bn_init(h1),
        "w2": w2, "b2": b2, "bn2": bn_init(h2),
        "wf": wf, "bf": bf,
    }


def fold_params(mp, eps=1e-5):
    """Fold eval-mode BN into weights/biases, split w1, cast matmul operands to
    bf16, and lay out the final 1-output layer as a row for the VPU reduce."""
    D = mp["user_table"].shape[1]

    def bn_fold(w, b, bn):
        scale = bn["gamma"] / jnp.sqrt(bn["var"] + eps)        # [1, H]
        shift = bn["beta"] - bn["mean"] * scale
        return w * scale, b * scale + shift

    w1f, b1f = bn_fold(mp["w1"], mp["b1"], mp["bn1"])
    w2f, b2f = bn_fold(mp["w2"], mp["b2"], mp["bn2"])

    return {
        "user_table": mp["user_table"],
        "item_table": mp["item_table"],
        "w1u": w1f[:D].astype(jnp.bfloat16),
        "w1i": w1f[D:].astype(jnp.bfloat16),
        "b1": b1f.astype(jnp.float32),
        "w2": w2f.astype(jnp.bfloat16),
        "b2": b2f.astype(jnp.float32),
        "wf": mp["wf"].T.astype(jnp.float32),                  # [1, H2]
        "bf": mp["bf"].astype(jnp.float32),                    # [1, 1]
    }


def reference_forward(user_ids, item_ids, mp, eps=1e-5):
    """Pure-JAX f32 reference of the torch module (eval mode)."""
    u = jnp.take(mp["user_table"], user_ids, axis=0)
    it = jnp.take(mp["item_table"], item_ids, axis=0)
    if u.shape[0] == 1:
        u = jnp.broadcast_to(u, (it.shape[0], u.shape[1]))
    x = jnp.concatenate([u, it], axis=-1)

    def bn(z, p):
        return (z - p["mean"]) / jnp.sqrt(p["var"] + eps) * p["gamma"] + p["beta"]

    h = jnp.maximum(bn(x @ mp["w1"] + mp["b1"], mp["bn1"]), 0.0)
    h = jnp.maximum(bn(h @ mp["w2"] + mp["b2"], mp["bn2"]), 0.0)
    out = h @ mp["wf"] + mp["bf"]
    return out[:, 0]                                           # .squeeze(1)


if __name__ == "__main__":
    key = jax.random.PRNGKey(0)
    input_size = 32                 # embedding dim D
    hidden_sizes = (64, 32)         # hidden_layers = [(64, BN, 0.0), (32, BN, 0.0)]
    final_size = 1                  # final Linear -> [N, 1] -> squeeze(1)
    num_users, num_items = 64, 512
    n_query_items = 200             # not a tile multiple -> exercises padding
    tile_n = 128                    # grid of 2 steps

    pkey, ukey, ikey = jax.random.split(key, 3)
    mparams = make_module_params(pkey, num_users, num_items, input_size,
                                 hidden_sizes, final_size)
    kparams = fold_params(mparams)

    # Case 1: single query user (exercises the expand/broadcast path).
    user_ids_1 = jax.random.randint(ukey, (1,), 0, num_users)
    item_ids = jax.random.randint(ikey, (n_query_items,), 0, num_items)
    out1 = interaction_recommender_forward(user_ids_1, item_ids, kparams,
                                           tile_n=tile_n)
    out1 = jax.block_until_ready(out1)
    ref1 = reference_forward(user_ids_1, item_ids, mparams)
    assert out1.shape == (n_query_items,)
    assert jnp.allclose(out1, ref1, atol=2e-2, rtol=2e-2), \
        float(jnp.max(jnp.abs(out1 - ref1)))

    # Case 2: per-item query users (no expand path).
    user_ids_n = jax.random.randint(ukey, (n_query_items,), 0, num_users)
    out2 = interaction_recommender_forward(user_ids_n, item_ids, kparams,
                                           tile_n=tile_n)
    out2 = jax.block_until_ready(out2)
    ref2 = reference_forward(user_ids_n, item_ids, mparams)
    assert out2.shape == (n_query_items,)
    assert jnp.allclose(out2, ref2, atol=2e-2, rtol=2e-2), \
        float(jnp.max(jnp.abs(out2 - ref2)))

    print("KERNEL_OK")
</pallas_src>

<mosaic_0001>
module attributes {stable_mosaic.version = 11 : i64} {
  func.func @interaction_kernel(%arg0: i32, %arg1: memref<1x32xbf16, #tpu.memory_space<vmem>>, %arg2: memref<128x32xbf16, #tpu.memory_space<vmem>>, %arg3: memref<32x64xbf16, #tpu.memory_space<vmem>>, %arg4: memref<32x64xbf16, #tpu.memory_space<vmem>>, %arg5: memref<1x64xf32, #tpu.memory_space<vmem>>, %arg6: memref<64x32xbf16, #tpu.memory_space<vmem>>, %arg7: memref<1x32xf32, #tpu.memory_space<vmem>>, %arg8: memref<1x32xf32, #tpu.memory_space<vmem>>, %arg9: memref<1x1xf32, #tpu.memory_space<vmem>>, %arg10: memref<128x1xf32, #tpu.memory_space<vmem>>) attributes {dimension_semantics = [#tpu.dimension_semantics<parallel>], iteration_bounds = array<i64: 2>, scalar_prefetch = 0 : i64, scratch_operands = 0 : i64, tpu.core_type = #tpu.core_type<tc>, window_params = [{pipeline_mode = #tpu.pipeline_mode<synchronous>, transform_indices = @transform_0, window_bounds = array<i64: 1, 32>}, {transform_indices = @transform_1, window_bounds = array<i64: 128, 32>}, {pipeline_mode = #tpu.pipeline_mode<synchronous>, transform_indices = @transform_2, window_bounds = array<i64: 32, 64>}, {pipeline_mode = #tpu.pipeline_mode<synchronous>, transform_indices = @transform_3, window_bounds = array<i64: 32, 64>}, {pipeline_mode = #tpu.pipeline_mode<synchronous>, transform_indices = @transform_4, window_bounds = array<i64: 1, 64>}, {pipeline_mode = #tpu.pipeline_mode<synchronous>, transform_indices = @transform_5, window_bounds = array<i64: 64, 32>}, {pipeline_mode = #tpu.pipeline_mode<synchronous>, transform_indices = @transform_6, window_bounds = array<i64: 1, 32>}, {pipeline_mode = #tpu.pipeline_mode<synchronous>, transform_indices = @transform_7, window_bounds = array<i64: 1, 32>}, {pipeline_mode = #tpu.pipeline_mode<synchronous>, transform_indices = @transform_8, window_bounds = array<i64: 1, 1>}, {transform_indices = @transform_9, window_bounds = array<i64: 128, 1>}]} {
    %c0 = arith.constant 0 : index
    %c0_0 = arith.constant 0 : index
    %0 = vector.load %arg1[%c0, %c0_0] : memref<1x32xbf16, #tpu.memory_space<vmem>>, vector<1x32xbf16>
    %c0_1 = arith.constant 0 : index
    %c0_2 = arith.constant 0 : index
    %1 = vector.load %arg3[%c0_1, %c0_2] : memref<32x64xbf16, #tpu.memory_space<vmem>>, vector<32x64xbf16>
    %cst = arith.constant dense<0.000000e+00> : vector<1x64xf32>
    %2 = tpu.matmul %0, %1, %cst {dimension_numbers = #tpu.dot_dimension_numbers<[1], [0], [0], [1], [0, 0, 1, 1], [], []>} : vector<1x32xbf16>, vector<32x64xbf16>, vector<1x64xf32> -> vector<1x64xf32>
    %c0_3 = arith.constant 0 : index
    %c0_4 = arith.constant 0 : index
    %3 = vector.load %arg2[%c0_3, %c0_4] : memref<128x32xbf16, #tpu.memory_space<vmem>>, vector<128x32xbf16>
    %c0_5 = arith.constant 0 : index
    %c0_6 = arith.constant 0 : index
    %4 = vector.load %arg4[%c0_5, %c0_6] : memref<32x64xbf16, #tpu.memory_space<vmem>>, vector<32x64xbf16>
    %cst_7 = arith.constant dense<0.000000e+00> : vector<128x64xf32>
    %5 = tpu.matmul %3, %4, %cst_7 {dimension_numbers = #tpu.dot_dimension_numbers<[1], [0], [0], [1], [0, 0, 1, 1], [], []>} : vector<128x32xbf16>, vector<32x64xbf16>, vector<128x64xf32> -> vector<128x64xf32>
    %6 = vector.broadcast %2 : vector<1x64xf32> to vector<128x64xf32>
    %7 = arith.addf %5, %6 : vector<128x64xf32>
    %c0_8 = arith.constant 0 : index
    %c0_9 = arith.constant 0 : index
    %8 = vector.load %arg5[%c0_8, %c0_9] : memref<1x64xf32, #tpu.memory_space<vmem>>, vector<1x64xf32>
    %9 = vector.broadcast %8 : vector<1x64xf32> to vector<128x64xf32>
    %10 = arith.addf %7, %9 : vector<128x64xf32>
    %cst_10 = arith.constant 0.000000e+00 : f32
    %11 = vector.broadcast %cst_10 : f32 to vector<128x64xf32>
    %12 = arith.maximumf %10, %11 : vector<128x64xf32>
    %13 = arith.truncf %12 : vector<128x64xf32> to vector<128x64xbf16>
    %c0_11 = arith.constant 0 : index
    %c0_12 = arith.constant 0 : index
    %14 = vector.load %arg6[%c0_11, %c0_12] : memref<64x32xbf16, #tpu.memory_space<vmem>>, vector<64x32xbf16>
    %cst_13 = arith.constant dense<0.000000e+00> : vector<128x32xf32>
    %15 = tpu.matmul %13, %14, %cst_13 {dimension_numbers = #tpu.dot_dimension_numbers<[1], [0], [0], [1], [0, 0, 1, 1], [], []>} : vector<128x64xbf16>, vector<64x32xbf16>, vector<128x32xf32> -> vector<128x32xf32>
    %c0_14 = arith.constant 0 : index
    %c0_15 = arith.constant 0 : index
    %16 = vector.load %arg7[%c0_14, %c0_15] : memref<1x32xf32, #tpu.memory_space<vmem>>, vector<1x32xf32>
    %17 = vector.broadcast %16 : vector<1x32xf32> to vector<128x32xf32>
    %18 = arith.addf %15, %17 : vector<128x32xf32>
    %cst_16 = arith.constant 0.000000e+00 : f32
    %19 = vector.broadcast %cst_16 : f32 to vector<128x32xf32>
    %20 = arith.maximumf %18, %19 : vector<128x32xf32>
    %c0_17 = arith.constant 0 : index
    %c0_18 = arith.constant 0 : index
    %21 = vector.load %arg8[%c0_17, %c0_18] : memref<1x32xf32, #tpu.memory_space<vmem>>, vector<1x32xf32>
    %22 = vector.broadcast %21 : vector<1x32xf32> to vector<128x32xf32>
    %23 = arith.mulf %20, %22 : vector<128x32xf32>
    %cst_19 = arith.constant dense<0.000000e+00> : vector<128xf32>
    %24 = vector.multi_reduction <add>, %23, %cst_19 [1] : vector<128x32xf32> to vector<128xf32>
    %25 = vector.shape_cast %24 : vector<128xf32> to vector<128x1xf32>
    %c0_20 = arith.constant 0 : index
    %c0_21 = arith.constant 0 : index
    %26 = vector.load %arg9[%c0_20, %c0_21] : memref<1x1xf32, #tpu.memory_space<vmem>>, vector<1x1xf32>
    %27 = vector.broadcast %26 : vector<1x1xf32> to vector<128x1xf32>
    %28 = arith.addf %25, %27 : vector<128x1xf32>
    %c0_22 = arith.constant 0 : index
    %c0_23 = arith.constant 0 : index
    %29 = vector.load %arg10[%c0_22, %c0_23] : memref<128x1xf32, #tpu.memory_space<vmem>>, vector<128x1xf32>
    tpu.vector_store %arg10[%c0_22, %c0_23], %28 {strides = array<i32>} : memref<128x1xf32, #tpu.memory_space<vmem>>, vector<128x1xf32>,
    return
  }
  func.func @transform_0(%arg0: i32) -> (i32, i32) {
    %c0_i32 = arith.constant 0 : i32
    %c0_i32_0 = arith.constant 0 : i32
    %c0_i32_1 = arith.constant 0 : i32
    return %c0_i32, %c0_i32_0 : i32, i32
  }
  func.func @transform_1(%arg0: i32) -> (i32, i32) {
    %c0_i32 = arith.constant 0 : i32
    %c0_i32_0 = arith.constant 0 : i32
    return %arg0, %c0_i32 : i32, i32
  }
  func.func @transform_2(%arg0: i32) -> (i32, i32) {
    %c0_i32 = arith.constant 0 : i32
    %c0_i32_0 = arith.constant 0 : i32
    %c0_i32_1 = arith.constant 0 : i32
    return %c0_i32, %c0_i32_0 : i32, i32
  }
  func.func @transform_3(%arg0: i32) -> (i32, i32) {
    %c0_i32 = arith.constant 0 : i32
    %c0_i32_0 = arith.constant 0 : i32
    %c0_i32_1 = arith.constant 0 : i32
    return %c0_i32, %c0_i32_0 : i32, i32
  }
  func.func @transform_4(%arg0: i32) -> (i32, i32) {
    %c0_i32 = arith.constant 0 : i32
    %c0_i32_0 = arith.constant 0 : i32
    %c0_i32_1 = arith.constant 0 : i32
    return %c0_i32, %c0_i32_0 : i32, i32
  }
  func.func @transform_5(%arg0: i32) -> (i32, i32) {
    %c0_i32 = arith.constant 0 : i32
    %c0_i32_0 = arith.constant 0 : i32
    %c0_i32_1 = arith.constant 0 : i32
    return %c0_i32, %c0_i32_0 : i32, i32
  }
  func.func @transform_6(%arg0: i32) -> (i32, i32) {
    %c0_i32 = arith.constant 0 : i32
    %c0_i32_0 = arith.constant 0 : i32
    %c0_i32_1 = arith.constant 0 : i32
    return %c0_i32, %c0_i32_0 : i32, i32
  }
  func.func @transform_7(%arg0: i32) -> (i32, i32) {
    %c0_i32 = arith.constant 0 : i32
    %c0_i32_0 = arith.constant 0 : i32
    %c0_i32_1 = arith.constant 0 : i32
    return %c0_i32, %c0_i32_0 : i32, i32
  }
  func.func @transform_8(%arg0: i32) -> (i32, i32) {
    %c0_i32 = arith.constant 0 : i32
    %c0_i32_0 = arith.constant 0 : i32
    %c0_i32_1 = arith.constant 0 : i32
    return %c0_i32, %c0_i32_0 : i32, i32
  }
  func.func @transform_9(%arg0: i32) -> (i32, i32) {
    %c0_i32 = arith.constant 0 : i32
    %c0_i32_0 = arith.constant 0 : i32
    return %arg0, %c0_i32 : i32, i32
  }
}

</mosaic_0001>

<llo_original>
// kernel: tpu_custom_call.1
$region0: #{tpu_custom_call.1}
  #allocation0 [shape = 'u32[]', space=smem, size = 0x4, offset = 0x4, fixed_abs, tag = 'smem constant byte address 0x4 - core index']
  #allocation1 [shape = 'u32[144,128]{1,0:T(1,128)}', space=vmem, size = 0x12000, scoped, tag = 'internal scratch']
  #allocation2 [shape = 'f32[1,1]{1,0:T(1,128)S(1)}', space=vmem, size = 0x200, scoped, tag = 'scoped memory for tpu_custom_call.1']
  %s0 = inlined_call_operand.vmem [shape: bf16[1,32], index: 0, kind: input, shape index: {}]
  %s1 = inlined_call_operand.vmem [shape: bf16[256,32], index: 1, kind: input, shape index: {}]
  %s2 = inlined_call_operand.vmem [shape: bf16[32,64], index: 2, kind: input, shape index: {}]
  %s3 = inlined_call_operand.vmem [shape: bf16[32,64], index: 3, kind: input, shape index: {}]
  %s4 = inlined_call_operand.vmem [shape: f32[1,64], index: 4, kind: input, shape index: {}]
  %s5 = inlined_call_operand.vmem [shape: bf16[64,32], index: 5, kind: input, shape index: {}]
  %s6 = inlined_call_operand.vmem [shape: f32[1,32], index: 6, kind: input, shape index: {}]
  %s7 = inlined_call_operand.vmem [shape: f32[1,32], index: 7, kind: input, shape index: {}]
  %s8 = inlined_call_operand.<no memory space> [shape: f32[1,1], index: 8, kind: input, shape index: {}]
  %s9 = inlined_call_operand.vmem [shape: f32[256,1], index: 9, kind: output, shape index: {}]
  %s10 = sld [smem:[#allocation0]]
  $region69: #{tpu_custom_call.1} parent=0
    _
  %s12 = ssub.s32 1, %s10
  %s13 = scalar_select 0, %s12, %s10
  %v14 = vstv %s8
  %15 = vst [vmem:[#allocation2] sm:$0x1] %v14
  loop: start=0, step=1, limit=4
  $region2: #{tpu_custom_call.1} parent=0 // loop_pre_header
    _
  $region3: #{tpu_custom_call.1} parent=0 // loop_header
    %s17 = sphi 0, %s21
    %p18 = scmp.ge.s32.totalorder %s17, 4
    %s25 = sphi 0, %s25
    %s27 = sphi 0, %s25
    %s28 = sphi 0, %s27
    %s42 = sphi 0, %s28
    %s48 = sphi 0, %s50
    %s51 = sphi 0, %s48
    %s52 = sphi 0, %s51
    %s68 = sphi 0, %s52
    %s72 = sphi 0, %s72
    %s74 = sphi 0, %s72
    %s75 = sphi 0, %s74
    %s89 = sphi 0, %s75
    %s93 = sphi 0, %s93
    %s95 = sphi 0, %s93
    %s96 = sphi 0, %s95
    %s110 = sphi 0, %s96
    %s114 = sphi 0, %s114
    %s116 = sphi 0, %s114
    %s117 = sphi 0, %s116
    %s131 = sphi 0, %s117
    %s135 = sphi 0, %s135
    %s137 = sphi 0, %s135
    %s138 = sphi 0, %s137
    %s152 = sphi 0, %s138
    %s156 = sphi 0, %s156
    %s158 = sphi 0, %s156
    %s159 = sphi 0, %s158
    %s173 = sphi 0, %s159
    %s177 = sphi 0, %s177
    %s179 = sphi 0, %s177
    %s180 = sphi 0, %s179
    %s194 = sphi 0, %s180
    %s198 = sphi 0, %s198
    %s200 = sphi 0, %s198
    %s201 = sphi 0, %s200
    %s215 = sphi 0, %s201
    %s221 = sphi 0, %s223
    %s224 = sphi 0, %s221
    %s225 = sphi 0, %s224
    %s241 = sphi 0, %s225
  $region4: #{tpu_custom_call.1} parent=0 // loop_header_branch
    %20 = sbr.rel (%p18) target = $region8
  $region5: #{tpu_custom_call.1} parent=0 // loop_body
    %s22 = ssub.s32 %s17, 1
    %s23 = ssub.s32 %s17, 2
    %s24 = sadd.s32 %s17, 1
    %s26 = sadd.s32 %s25, 1
    %p29 = scmp.eq.s32.totalorder %s17, 1
    %p30 = scmp.ne.s32.totalorder %s25, %s27
    %p31 = scmp.eq.s32.totalorder %s17, 0
    %p32 = por %p30, %p31
    %p33 = scmp.ne.s32.totalorder %s25, %s27
    %p34 = scmp.eq.s32.totalorder %s22, 1
    %p35 = por %p33, %p34
    %p36 = scmp.ne.s32.totalorder %s27, %s28
    %p37 = scmp.eq.s32.totalorder %s22, 0
    %p38 = por %p36, %p37
    %p39 = scmp.ne.s32.totalorder %s27, %s28
    %p40 = scmp.eq.s32.totalorder %s23, 1
    %p41 = por %p39, %p40
    %p43 = scmp.ne.s32.totalorder %s28, %s42
    %p44 = scmp.eq.s32.totalorder %s23, 0
    %p45 = por %p43, %p44
    %s46 = ssub.s32 %s17, %s24
    %p47 = scmp.eq.s32.totalorder %s46, 0
    %s49 = sadd.s32 %s48, 1
    %s50 = scalar_select %p47, %s48, %s49
    %p53 = pneg %p47
    %p54 = scmp.eq.s32.totalorder %s17, 1
    %p55 = por %p53, %p54
    %p56 = scmp.ne.s32.totalorder %s48, %s51
    %p57 = scmp.eq.s32.totalorder %s17, 0
    %p58 = por %p56, %p57
    %p59 = scmp.ne.s32.totalorder %s48, %s51
    %p60 = scmp.eq.s32.totalorder %s22, 1
    %p61 = por %p59, %p60
    %p62 = scmp.ne.s32.totalorder %s51, %s52
    %p63 = scmp.eq.s32.totalorder %s22, 0
    %p64 = por %p62, %p63
    %p65 = scmp.ne.s32.totalorder %s51, %s52
    %p66 = scmp.eq.s32.totalorder %s23, 1
    %p67 = por %p65, %p66
    %p69 = scmp.ne.s32.totalorder %s52, %s68
    %p70 = scmp.eq.s32.totalorder %s23, 0
    %p71 = por %p69, %p70
    %s73 = sadd.s32 %s72, 1
    %p76 = scmp.eq.s32.totalorder %s17, 1
    %p77 = scmp.ne.s32.totalorder %s72, %s74
    %p78 = scmp.eq.s32.totalorder %s17, 0
    %p79 = por %p77, %p78
    %p80 = scmp.ne.s32.totalorder %s72, %s74
    %p81 = scmp.eq.s32.totalorder %s22, 1
    %p82 = por %p80, %p81
    %p83 = scmp.ne.s32.totalorder %s74, %s75
    %p84 = scmp.eq.s32.totalorder %s22, 0
    %p85 = por %p83, %p84
    %p86 = scmp.ne.s32.totalorder %s74, %s75
    %p87 = scmp.eq.s32.totalorder %s23, 1
    %p88 = por %p86, %p87
    %p90 = scmp.ne.s32.totalorder %s75, %s89
    %p91 = scmp.eq.s32.totalorder %s23, 0
    %p92 = por %p90, %p91
    %s94 = sadd.s32 %s93, 1
    %p97 = scmp.eq.s32.totalorder %s17, 1
    %p98 = scmp.ne.s32.totalorder %s93, %s95
    %p99 = scmp.eq.s32.totalorder %s17, 0
    %p100 = por %p98, %p99
    %p101 = scmp.ne.s32.totalorder %s93, %s95
    %p102 = scmp.eq.s32.totalorder %s22, 1
    %p103 = por %p101, %p102
    %p104 = scmp.ne.s32.totalorder %s95, %s96
    %p105 = scmp.eq.s32.totalorder %s22, 0
    %p106 = por %p104, %p105
    %p107 = scmp.ne.s32.totalorder %s95, %s96
    %p108 = scmp.eq.s32.totalorder %s23, 1
    %p109 = por %p107, %p108
    %p111 = scmp.ne.s32.totalorder %s96, %s110
    %p112 = scmp.eq.s32.totalorder %s23, 0
    %p113 = por %p111, %p112
    %s115 = sadd.s32 %s114, 1
    %p118 = scmp.eq.s32.totalorder %s17, 1
    %p119 = scmp.ne.s32.totalorder %s114, %s116
    %p120 = scmp.eq.s32.totalorder %s17, 0
    %p121 = por %p119, %p120
    %p122 = scmp.ne.s32.totalorder %s114, %s116
    %p123 = scmp.eq.s32.totalorder %s22, 1
    %p124 = por %p122, %p123
    %p125 = scmp.ne.s32.totalorder %s116, %s117
    %p126 = scmp.eq.s32.totalorder %s22, 0
    %p127 = por %p125, %p126
    %p128 = scmp.ne.s32.totalorder %s116, %s117
    %p129 = scmp.eq.s32.totalorder %s23, 1
    %p130 = por %p128, %p129
    %p132 = scmp.ne.s32.totalorder %s117, %s131
    %p133 = scmp.eq.s32.totalorder %s23, 0
    %p134 = por %p132, %p133
    %s136 = sadd.s32 %s135, 1
    %p139 = scmp.eq.s32.totalorder %s17, 1
    %p140 = scmp.ne.s32.totalorder %s135, %s137
    %p141 = scmp.eq.s32.totalorder %s17, 0
    %p142 = por %p140, %p141
    %p143 = scmp.ne.s32.totalorder %s135, %s137
    %p144 = scmp.eq.s32.totalorder %s22, 1
    %p145 = por %p143, %p144
    %p146 = scmp.ne.s32.totalorder %s137, %s138
    %p147 = scmp.eq.s32.totalorder %s22, 0
    %p148 = por %p146, %p147
    %p149 = scmp.ne.s32.totalorder %s137, %s138
    %p150 = scmp.eq.s32.totalorder %s23, 1
    %p151 = por %p149, %p150
    %p153 = scmp.ne.s32.totalorder %s138, %s152
    %p154 = scmp.eq.s32.totalorder %s23, 0
    %p155 = por %p153, %p154
    %s157 = sadd.s32 %s156, 1
    %p160 = scmp.eq.s32.totalorder %s17, 1
    %p161 = scmp.ne.s32.totalorder %s156, %s158
    %p162 = scmp.eq.s32.totalorder %s17, 0
    %p163 = por %p161, %p162
    %p164 = scmp.ne.s32.totalorder %s156, %s158
    %p165 = scmp.eq.s32.totalorder %s22, 1
    %p166 = por %p164, %p165
    %p167 = scmp.ne.s32.totalorder %s158, %s159
    %p168 = scmp.eq.s32.totalorder %s22, 0
    %p169 = por %p167, %p168
    %p170 = scmp.ne.s32.totalorder %s158, %s159
    %p171 = scmp.eq.s32.totalorder %s23, 1
    %p172 = por %p170, %p171
    %p174 = scmp.ne.s32.totalorder %s159, %s173
    %p175 = scmp.eq.s32.totalorder %s23, 0
    %p176 = por %p174, %p175
    %s178 = sadd.s32 %s177, 1
    %p181 = scmp.eq.s32.totalorder %s17, 1
    %p182 = scmp.ne.s32.totalorder %s177, %s179
    %p183 = scmp.eq.s32.totalorder %s17, 0
    %p184 = por %p182, %p183
    %p185 = scmp.ne.s32.totalorder %s177, %s179
    %p186 = scmp.eq.s32.totalorder %s22, 1
    %p187 = por %p185, %p186
    %p188 = scmp.ne.s32.totalorder %s179, %s180
    %p189 = scmp.eq.s32.totalorder %s22, 0
    %p190 = por %p188, %p189
    %p191 = scmp.ne.s32.totalorder %s179, %s180
    %p192 = scmp.eq.s32.totalorder %s23, 1
    %p193 = por %p191, %p192
    %p195 = scmp.ne.s32.totalorder %s180, %s194
    %p196 = scmp.eq.s32.totalorder %s23, 0
    %p197 = por %p195, %p196
    %s199 = sadd.s32 %s198, 1
    %p202 = scmp.eq.s32.totalorder %s17, 1
    %p203 = scmp.ne.s32.totalorder %s198, %s200
    %p204 = scmp.eq.s32.totalorder %s17, 0
    %p205 = por %p203, %p204
    %p206 = scmp.ne.s32.totalorder %s198, %s200
    %p207 = scmp.eq.s32.totalorder %s22, 1
    %p208 = por %p206, %p207
    %p209 = scmp.ne.s32.totalorder %s200, %s201
    %p210 = scmp.eq.s32.totalorder %s22, 0
    %p211 = por %p209, %p210
    %p212 = scmp.ne.s32.totalorder %s200, %s201
    %p213 = scmp.eq.s32.totalorder %s23, 1
    %p214 = por %p212, %p213
    %p216 = scmp.ne.s32.totalorder %s201, %s215
    %p217 = scmp.eq.s32.totalorder %s23, 0
    %p218 = por %p216, %p217
    %s219 = ssub.s32 %s17, %s24
    %p220 = scmp.eq.s32.totalorder %s219, 0
    %s222 = sadd.s32 %s221, 1
    %s223 = scalar_select %p220, %s221, %s222
    %p226 = pneg %p220
    %p227 = scmp.eq.s32.totalorder %s17, 1
    %p228 = por %p226, %p227
    %p229 = scmp.ne.s32.totalorder %s221, %s224
    %p230 = scmp.eq.s32.totalorder %s17, 0
    %p231 = por %p229, %p230
    %p232 = scmp.ne.s32.totalorder %s221, %s224
    %p233 = scmp.eq.s32.totalorder %s22, 1
    %p234 = por %p232, %p233
    %p235 = scmp.ne.s32.totalorder %s224, %s225
    %p236 = scmp.eq.s32.totalorder %s22, 0
    %p237 = por %p235, %p236
    %p238 = scmp.ne.s32.totalorder %s224, %s225
    %p239 = scmp.eq.s32.totalorder %s23, 1
    %p240 = por %p238, %p239
    %p242 = scmp.ne.s32.totalorder %s225, %s241
    %p243 = scmp.eq.s32.totalorder %s23, 0
    %p244 = por %p242, %p243
    %p245 = scmp.le.s32.totalorder 1, %s17
    %p246 = scmp.lt.s32.totalorder %s17, 3
    %p247 = pnand %p245, %p246
    %p248 = pneg %p247
    // Predicated region
    $region9: #{tpu_custom_call.1} parent=5 // pred_check
      _
    $region10: #{tpu_custom_call.1} parent=5 // pred_check_branch
      %250 = sbr.rel (%p247) target = $region12
    $region11: #{tpu_custom_call.1} parent=5 // pred_region
      %s251 = ssub.s32 %s17, 1
      // Predicated region
      $region13: #{tpu_custom_call.1} parent=11 // pred_check
        %p252 = pneg %p38
      $region14: #{tpu_custom_call.1} parent=11 // pred_check_branch
        %254 = sbr.rel (%p252) target = $region16
      $region15: #{tpu_custom_call.1} parent=11 // pred_region
        _
      $region16: #{tpu_custom_call.1} parent=11 // pred_fallthru
        _
      // Predicated region
      $region17: #{tpu_custom_call.1} parent=11 // pred_check
        %p255 = pneg %p85
      $region18: #{tpu_custom_call.1} parent=11 // pred_check_branch
        %257 = sbr.rel (%p255) target = $region20
      $region19: #{tpu_custom_call.1} parent=11 // pred_region
        _
      $region20: #{tpu_custom_call.1} parent=11 // pred_fallthru
        _
      // Predicated region
      $region21: #{tpu_custom_call.1} parent=11 // pred_check
        %p258 = pneg %p106
      $region22: #{tpu_custom_call.1} parent=11 // pred_check_branch
        %260 = sbr.rel (%p258) target = $region24
      $region23: #{tpu_custom_call.1} parent=11 // pred_region
        _
      $region24: #{tpu_custom_call.1} parent=11 // pred_fallthru
        _
      // Predicated region
      $region25: #{tpu_custom_call.1} parent=11 // pred_check
        %p261 = pneg %p127
      $region26: #{tpu_custom_call.1} parent=11 // pred_check_branch
        %263 = sbr.rel (%p261) target = $region28
      $region27: #{tpu_custom_call.1} parent=11 // pred_region
        _
      $region28: #{tpu_custom_call.1} parent=11 // pred_fallthru
        _
      // Predicated region
      $region29: #{tpu_custom_call.1} parent=11 // pred_check
        %p264 = pneg %p148
      $region30: #{tpu_custom_call.1} parent=11 // pred_check_branch
        %266 = sbr.rel (%p264) target = $region32
      $region31: #{tpu_custom_call.1} parent=11 // pred_region
        _
      $region32: #{tpu_custom_call.1} parent=11 // pred_fallthru
        _
      // Predicated region
      $region33: #{tpu_custom_call.1} parent=11 // pred_check
        %p267 = pneg %p169
      $region34: #{tpu_custom_call.1} parent=11 // pred_check_branch
        %269 = sbr.rel (%p267) target = $region36
      $region35: #{tpu_custom_call.1} parent=11 // pred_region
        _
      $region36: #{tpu_custom_call.1} parent=11 // pred_fallthru
        _
      // Predicated region
      $region37: #{tpu_custom_call.1} parent=11 // pred_check
        %p270 = pneg %p190
      $region38: #{tpu_custom_call.1} parent=11 // pred_check_branch
        %272 = sbr.rel (%p270) target = $region40
      $region39: #{tpu_custom_call.1} parent=11 // pred_region
        _
      $region40: #{tpu_custom_call.1} parent=11 // pred_fallthru
        _
      // Predicated region
      $region41: #{tpu_custom_call.1} parent=11 // pred_check
        %p273 = pneg %p211
      $region42: #{tpu_custom_call.1} parent=11 // pred_check_branch
        %275 = sbr.rel (%p273) target = $region44
      $region43: #{tpu_custom_call.1} parent=11 // pred_region
        _
      $region44: #{tpu_custom_call.1} parent=11 // pred_fallthru
        _
    $region12: #{tpu_custom_call.1} parent=5 // pred_fallthru
      _
    %p276 = scmp.lt.s32.totalorder %s17, 2
    // Predicated region
    $region45: #{tpu_custom_call.1} parent=5 // pred_check
      %p277 = pneg %p276
    $region46: #{tpu_custom_call.1} parent=5 // pred_check_branch
      %279 = sbr.rel (%p277) target = $region48
    $region47: #{tpu_custom_call.1} parent=5 // pred_region
      // Predicated region
      $region49: #{tpu_custom_call.1} parent=47 // pred_check
        %p280 = pneg %p58
      $region50: #{tpu_custom_call.1} parent=47 // pred_check_branch
        %282 = sbr.rel (%p280) target = $region52
      $region51: #{tpu_custom_call.1} parent=47 // pred_region
        %s283 = smul.u32 16, %s17
        %p284 = scmp.lt.s32.totalorder %s283, 31
        %s285 = scalar_select %p284, %s283, 31
        %s286 = smul.addr %s285, 4
        %s287 = scalar_lea.vmem %s1, %s286
        %s288 = smul.u32 16, %s17
      $region52: #{tpu_custom_call.1} parent=47 // pred_fallthru
        _
    $region48: #{tpu_custom_call.1} parent=5 // pred_fallthru
      _
    %p289 = scmp.le.s32.totalorder 1, %s17
    %p290 = scmp.lt.s32.totalorder %s17, 3
    %p291 = pnand %p289, %p290
    %p292 = pneg %p291
    // Predicated region
    $region53: #{tpu_custom_call.1} parent=5 // pred_check
      _
    $region54: #{tpu_custom_call.1} parent=5 // pred_check_branch
      %294 = sbr.rel (%p291) target = $region56
    $region55: #{tpu_custom_call.1} parent=5 // pred_region
      %s295 = ssub.s32 %s17, 1
      %p296 = pneg %p38
      %p297 = pneg %p35
      %s298 = smul.u32 16, %s22
      %p299 = scmp.lt.s32.totalorder %s298, 31
      %s300 = scalar_select %p299, %s298, 31
      %s301 = smul.addr %s300, 4
      %s302 = scalar_lea.vmem %s1, %s301
      %p303 = pneg %p64
      %p304 = pneg %p61
      %p305 = pneg %p85
      %p306 = pneg %p82
      %p307 = pneg %p106
      %p308 = pneg %p103
      %p309 = pneg %p127
      %p310 = pneg %p124
      %p311 = pneg %p148
      %p312 = pneg %p145
      %p313 = pneg %p169
      %p314 = pneg %p166
      %p315 = pneg %p190
      %p316 = pneg %p187
      %p317 = pneg %p211
      %p318 = pneg %p208
      %p319 = pneg %p237
      %p320 = pneg %p234
      %s321 = smul.u32 16, %s22
      %p322 = scmp.lt.s32.totalorder %s321, 31
      %s323 = scalar_select %p322, %s321, 31
      %s324 = smul.addr %s323, 8
      %s325 = scalar_lea.vmem %s9, %s324
      %s326 = smul.u32 16, %s22
      %p327 = scmp.lt.s32.totalorder %s326, 31
      %s328 = scalar_select %p327, %s326, 31
      %s329 = smul.addr %s328, 4
      %s330 = scalar_lea.vmem %s1, %s329
      %s331 = smul.u32 16, %s22
      %s332 = smul.u32 16, %s22
      %p333 = scmp.lt.s32.totalorder %s332, 31
      %s334 = scalar_select %p333, %s332, 31
      %s335 = smul.addr %s334, 8
      %s336 = scalar_lea.vmem %s9, %s335
      %s337 = smul.u32 16, %s22
      %v339 = vld [vmem:[%s0] sm:$0x1]
      %v340 = vld [vmem:[%s2] sm:$0xf]
      %v341 = vld [vmem:[%s2 + $0x4] sm:$0xf]
      %v342 = vld [vmem:[%s2 + $0x8] sm:$0xf]
      %v343 = vld [vmem:[%s2 + $0xc] sm:$0xf]
      %v348 = vunpack.c.l.b16 %v340
      %v349 = vunpack.c.l.b16 %v341
      %v350 = vunpack.c.l.b16 %v342
      %v351 = vunpack.c.l.b16 %v343
      %v352 = vpack.c.b16 %v349, %v348
      %v353 = vpack.c.b16 %v351, %v350
      %vm356 = vcmask 261120
      %v358 = vsel %vm356, %v339, 0
      %360 = vmatprep.subr.bf16.mxu0 0
      %361 = vmatpush1.bf16.msra.mxu0 %v352
      %362 = vmatprep.subr.bf16.mxu0 0
      %363 = vmatpush1.bf16.msra.mxu0 %v353
      %364 = vmatprep.subr.bf16.mxu0 0
      %365 = vmatpush1.bf16.msra.mxu0 0
      %366 = vmatprep.subr.bf16.mxu0 0
      %367 = vmatpush1.bf16.msra.mxu0 0
      %368 = vmatprep.subr.bf16.mxu0 0
      %369 = vmatpush1.bf16.msra.mxu0 0
      %370 = vmatprep.subr.bf16.mxu0 0
      %371 = vmatpush1.bf16.msra.mxu0 0
      %372 = vmatprep.subr.bf16.mxu0 0
      %373 = vmatpush1.bf16.msra.mxu0 0
      %374 = vmatprep.subr.bf16.mxu0 0
      %375 = vmatpush1.bf16.msra.mxu0 0
      %376 = vmatprep.subr.bf16.mxu0 0
      %377 = vmatpush1.bf16.msra.mxu0 0
      %378 = vmatprep.subr.bf16.mxu0 0
      %379 = vmatpush1.bf16.msra.mxu0 0
      %380 = vmatprep.subr.bf16.mxu0 0
      %381 = vmatpush1.bf16.msra.mxu0 0
      %382 = vmatprep.subr.bf16.mxu0 0
      %383 = vmatpush1.bf16.msra.mxu0 0
      %384 = vmatprep.subr.bf16.mxu0 0
      %385 = vmatpush1.bf16.msra.mxu0 0
      %386 = vmatprep.subr.bf16.mxu0 0
      %387 = vmatpush1.bf16.msra.mxu0 0
      %388 = vmatprep.subr.bf16.mxu0 0
      %389 = vmatpush1.bf16.msra.mxu0 0
      %390 = vmatprep.subr.bf16.mxu0 0
      %391 = vmatpush1.bf16.msra.mxu0 0
      %392 = vmatprep.mubr.bf16.mxu0 0
      %393 = vmatmul.mubr.bf16.gmra.mrb[0].mxu0 %v358
      %v394 = vpop.f32.mrb[0].mxu0
      %v395 = vadd.f32 0.0, %v394
      %v396 = vpop.f32.mrb[0].mxu0
      %v397 = vpop.f32.mrb[0].mxu0
      %v398 = vpop.f32.mrb[0].mxu0
      %399 = vdwg.mxu0
      %v400 = vld [vmem:[%s330] sm:$0xf]
      %v401 = vld [vmem:[%s330 + $0x4] sm:$0xf]
      %v402 = vld [vmem:[%s330 + $0x8] sm:$0xf]
      %v403 = vld [vmem:[%s330 + $0xc] sm:$0xf]
      %v404 = vld [vmem:[%s330 + $0x10] sm:$0xf]
      %v405 = vld [vmem:[%s330 + $0x14] sm:$0xf]
      %v406 = vld [vmem:[%s330 + $0x18] sm:$0xf]
      %v407 = vld [vmem:[%s330 + $0x1c] sm:$0xf]
      %v408 = vld [vmem:[%s330 + $0x20] sm:$0xf]
      %v409 = vld [vmem:[%s330 + $0x24] sm:$0xf]
      %v410 = vld [vmem:[%s330 + $0x28] sm:$0xf]
      %v411 = vld [vmem:[%s330 + $0x2c] sm:$0xf]
      %v412 = vld [vmem:[%s330 + $0x30] sm:$0xf]
      %v413 = vld [vmem:[%s330 + $0x34] sm:$0xf]
      %v414 = vld [vmem:[%s330 + $0x38] sm:$0xf]
      %v415 = vld [vmem:[%s330 + $0x3c] sm:$0xf]
      %v416 = vld [vmem:[%s3] sm:$0xf]
      %v417 = vld [vmem:[%s3 + $0x4] sm:$0xf]
      %v418 = vld [vmem:[%s3 + $0x8] sm:$0xf]
      %v419 = vld [vmem:[%s3 + $0xc] sm:$0xf]
      %v420 = vlaneseq
      %v421 = vshrl.u32 %v420, 7
      %v422 = vsub.s32 0, %v421
      %v423 = vrot.slane %v395, %v422
      %v440 = vunpack.c.l.b16 %v400
      %v441 = vunpack.c.l.b16 %v401
      %v442 = vunpack.c.l.b16 %v402
      %v443 = vunpack.c.l.b16 %v403
      %v444 = vunpack.c.l.b16 %v404
      %v445 = vunpack.c.l.b16 %v405
      %v446 = vunpack.c.l.b16 %v406
      %v447 = vunpack.c.l.b16 %v407
      %v448 = vunpack.c.l.b16 %v408
      %v449 = vunpack.c.l.b16 %v409
      %v450 = vunpack.c.l.b16 %v410
      %v451 = vunpack.c.l.b16 %v411
      %v452 = vunpack.c.l.b16 %v412
      %v453 = vunpack.c.l.b16 %v413
      %v454 = vunpack.c.l.b16 %v414
      %v455 = vunpack.c.l.b16 %v415
      %v456 = vpack.c.b16 %v441, %v440
      %v457 = vpack.c.b16 %v443, %v442
      %v458 = vpack.c.b16 %v445, %v444
      %v459 = vpack.c.b16 %v447, %v446
      %v460 = vpack.c.b16 %v449, %v448
      %v461 = vpack.c.b16 %v451, %v450
      %v462 = vpack.c.b16 %v453, %v452
      %v463 = vpack.c.b16 %v455, %v454
      %v468 = vunpack.c.l.b16 %v416
      %v469 = vunpack.c.l.b16 %v417
      %v470 = vunpack.c.l.b16 %v418
      %v471 = vunpack.c.l.b16 %v419
      %v472 = vpack.c.b16 %v469, %v468
      %v473 = vpack.c.b16 %v471, %v470
      %v477 = vsel %vm356, %v456, 0
      %v480 = vsel %vm356, %v457, 0
      %v483 = vsel %vm356, %v458, 0
      %v486 = vsel %vm356, %v459, 0
      %v489 = vsel %vm356, %v460, 0
      %v492 = vsel %vm356, %v461, 0
      %v495 = vsel %vm356, %v462, 0
      %v498 = vsel %vm356, %v463, 0
      %500 = vmatprep.subr.bf16.mxu0 0
      %501 = vmatpush1.bf16.msra.mxu0 %v472
      %502 = vmatprep.subr.bf16.mxu0 0
      %503 = vmatpush1.bf16.msra.mxu0 %v473
      %504 = vmatprep.subr.bf16.mxu0 0
      %505 = vmatpush1.bf16.msra.mxu0 0
      %506 = vmatprep.subr.bf16.mxu0 0
      %507 = vmatpush1.bf16.msra.mxu0 0
      %508 = vmatprep.subr.bf16.mxu0 0
      %509 = vmatpush1.bf16.msra.mxu0 0
      %510 = vmatprep.subr.bf16.mxu0 0
      %511 = vmatpush1.bf16.msra.mxu0 0
      %512 = vmatprep.subr.bf16.mxu0 0
      %513 = vmatpush1.bf16.msra.mxu0 0
      %514 = vmatprep.subr.bf16.mxu0 0
      %515 = vmatpush1.bf16.msra.mxu0 0
      %516 = vmatprep.subr.bf16.mxu0 0
      %517 = vmatpush1.bf16.msra.mxu0 0
      %518 = vmatprep.subr.bf16.mxu0 0
      %519 = vmatpush1.bf16.msra.mxu0 0
      %520 = vmatprep.subr.bf16.mxu0 0
      %521 = vmatpush1.bf16.msra.mxu0 0
      %522 = vmatprep.subr.bf16.mxu0 0
      %523 = vmatpush1.bf16.msra.mxu0 0
      %524 = vmatprep.subr.bf16.mxu0 0
      %525 = vmatpush1.bf16.msra.mxu0 0
      %526 = vmatprep.subr.bf16.mxu0 0
      %527 = vmatpush1.bf16.msra.mxu0 0
      %528 = vmatprep.subr.bf16.mxu0 0
      %529 = vmatpush1.bf16.msra.mxu0 0
      %530 = vmatprep.subr.bf16.mxu0 0
      %531 = vmatpush1.bf16.msra.mxu0 0
      %532 = vmatprep.mubr.bf16.mxu0 0
      %533 = vmatmul.mubr.bf16.gmra.mrb[0].mxu0 %v477
      %v534 = vpop.f32.mrb[0].mxu0
      %v535 = vadd.f32 %v423, %v534
      %v536 = vpop.f32.mrb[0].mxu0
      %v537 = vpop.f32.mrb[0].mxu0
      %v538 = vadd.f32 %v423, %v537
      %v539 = vpop.f32.mrb[0].mxu0
      %540 = vmatprep.mubr.bf16.mxu0 0
      %541 = vmatmul.mubr.bf16.gmra.mrb[0].mxu0 %v480
      %v542 = vpop.f32.mrb[0].mxu0
      %v543 = vadd.f32 %v423, %v542
      %v544 = vpop.f32.mrb[0].mxu0
      %v545 = vpop.f32.mrb[0].mxu0
      %v546 = vadd.f32 %v423, %v545
      %v547 = vpop.f32.mrb[0].mxu0
      %548 = vmatprep.mubr.bf16.mxu0 0
      %549 = vmatmul.mubr.bf16.gmra.mrb[0].mxu0 %v483
      %v550 = vpop.f32.mrb[0].mxu0
      %v551 = vadd.f32 %v423, %v550
      %v552 = vpop.f32.mrb[0].mxu0
      %v553 = vpop.f32.mrb[0].mxu0
      %v554 = vadd.f32 %v423, %v553
      %v555 = vpop.f32.mrb[0].mxu0
      %556 = vmatprep.mubr.bf16.mxu0 0
      %557 = vmatmul.mubr.bf16.gmra.mrb[0].mxu0 %v486
      %v558 = vpop.f32.mrb[0].mxu0
      %v559 = vadd.f32 %v423, %v558
      %v560 = vpop.f32.mrb[0].mxu0
      %v561 = vpop.f32.mrb[0].mxu0
      %v562 = vadd.f32 %v423, %v561
      %v563 = vpop.f32.mrb[0].mxu0
      %564 = vmatprep.mubr.bf16.mxu0 0
      %565 = vmatmul.mubr.bf16.gmra.mrb[0].mxu0 %v489
      %v566 = vpop.f32.mrb[0].mxu0
      %v567 = vadd.f32 %v423, %v566
      %v568 = vpop.f32.mrb[0].mxu0
      %v569 = vpop.f32.mrb[0].mxu0
      %v570 = vadd.f32 %v423, %v569
      %v571 = vpop.f32.mrb[0].mxu0
      %572 = vmatprep.mubr.bf16.mxu0 0
      %573 = vmatmul.mubr.bf16.gmra.mrb[0].mxu0 %v492
      %v574 = vpop.f32.mrb[0].mxu0
      %v575 = vadd.f32 %v423, %v574
      %v576 = vpop.f32.mrb[0].mxu0
      %v577 = vpop.f32.mrb[0].mxu0
      %v578 = vadd.f32 %v423, %v577
      %v579 = vpop.f32.mrb[0].mxu0
      %580 = vmatprep.mubr.bf16.mxu0 0
      %581 = vmatmul.mubr.bf16.gmra.mrb[0].mxu0 %v495
      %v582 = vpop.f32.mrb[0].mxu0
      %v583 = vadd.f32 %v423, %v582
      %v584 = vpop.f32.mrb[0].mxu0
      %v585 = vpop.f32.mrb[0].mxu0
      %v586 = vadd.f32 %v423, %v585
      %v587 = vpop.f32.mrb[0].mxu0
      %588 = vmatprep.mubr.bf16.mxu0 0
      %589 = vmatmul.mubr.bf16.gmra.mrb[0].mxu0 %v498
      %v590 = vpop.f32.mrb[0].mxu0
      %v591 = vadd.f32 %v423, %v590
      %v592 = vpop.f32.mrb[0].mxu0
      %v593 = vpop.f32.mrb[0].mxu0
      %v594 = vadd.f32 %v423, %v593
      %v595 = vpop.f32.mrb[0].mxu0
      %596 = vdwg.mxu0
      %v597 = vld [vmem:[%s4] sm:$0x1]
      %v599 = vlaneseq
      %v600 = vshrl.u32 %v599, 7
      %v601 = vsub.s32 0, %v600
      %v602 = vrot.slane %v597, %v601
      %v604 = vadd.f32 %v535, %v602
      %v605 = vadd.f32 %v538, %v602
      %v606 = vadd.f32 %v543, %v602
      %v607 = vadd.f32 %v546, %v602
      %v608 = vadd.f32 %v551, %v602
      %v609 = vadd.f32 %v554, %v602
      %v610 = vadd.f32 %v559, %v602
      %v611 = vadd.f32 %v562, %v602
      %v612 = vadd.f32 %v567, %v602
      %v613 = vadd.f32 %v570, %v602
      %v614 = vadd.f32 %v575, %v602
      %v615 = vadd.f32 %v578, %v602
      %v616 = vadd.f32 %v583, %v602
      %v617 = vadd.f32 %v586, %v602
      %v618 = vadd.f32 %v591, %v602
      %v619 = vadd.f32 %v594, %v602
      %v620 = vmax.f32 %v604, 0.0
      %v621 = vmax.f32 %v605, 0.0
      %v622 = vmax.f32 %v606, 0.0
      %v623 = vmax.f32 %v607, 0.0
      %v624 = vmax.f32 %v608, 0.0
      %v625 = vmax.f32 %v609, 0.0
      %v626 = vmax.f32 %v610, 0.0
      %v627 = vmax.f32 %v611, 0.0
      %v628 = vmax.f32 %v612, 0.0
      %v629 = vmax.f32 %v613, 0.0
      %v630 = vmax.f32 %v614, 0.0
      %v631 = vmax.f32 %v615, 0.0
      %v632 = vmax.f32 %v616, 0.0
      %v633 = vmax.f32 %v617, 0.0
      %v634 = vmax.f32 %v618, 0.0
      %v635 = vmax.f32 %v619, 0.0
      %v636 = vpack.c.bf16 %v621, %v620
      %v637 = vpack.c.bf16 %v623, %v622
      %v638 = vpack.c.bf16 %v625, %v624
      %v639 = vpack.c.bf16 %v627, %v626
      %v640 = vpack.c.bf16 %v629, %v628
      %v641 = vpack.c.bf16 %v631, %v630
      %v642 = vpack.c.bf16 %v633, %v632
      %v643 = vpack.c.bf16 %v635, %v634
      %v644 = vld [vmem:[%s5] sm:$0xf]
      %v645 = vld [vmem:[%s5 + $0x4] sm:$0xf]
      %v646 = vld [vmem:[%s5 + $0x8] sm:$0xf]
      %v647 = vld [vmem:[%s5 + $0xc] sm:$0xf]
      %v648 = vld [vmem:[%s5 + $0x10] sm:$0xf]
      %v649 = vld [vmem:[%s5 + $0x14] sm:$0xf]
      %v650 = vld [vmem:[%s5 + $0x18] sm:$0xf]
      %v651 = vld [vmem:[%s5 + $0x1c] sm:$0xf]
      %v652 = vld [vmem:[%s6] sm:$0x1]
      %v654 = vlaneseq
      %v655 = vshrl.u32 %v654, 7
      %v656 = vsub.s32 0, %v655
      %v657 = vrot.slane %v652, %v656
      %v667 = vunpack.c.l.b16 %v644
      %v668 = vunpack.c.l.b16 %v645
      %v669 = vunpack.c.l.b16 %v646
      %v670 = vunpack.c.l.b16 %v647
      %v671 = vunpack.c.l.b16 %v648
      %v672 = vunpack.c.l.b16 %v649
      %v673 = vunpack.c.l.b16 %v650
      %v674 = vunpack.c.l.b16 %v651
      %v675 = vpack.c.b16 %v668, %v667
      %v676 = vpack.c.b16 %v670, %v669
      %v677 = vpack.c.b16 %v672, %v671
      %v678 = vpack.c.b16 %v674, %v673
      %vm683 = vcmask 523264
      %v685 = vsel %vm683, %v636, 0
      %v688 = vsel %vm683, %v637, 0
      %v691 = vsel %vm683, %v638, 0
      %v694 = vsel %vm683, %v639, 0
      %v697 = vsel %vm683, %v640, 0
      %v700 = vsel %vm683, %v641, 0
      %v703 = vsel %vm683, %v642, 0
      %v706 = vsel %vm683, %v643, 0
      %708 = vmatprep.subr.bf16.mxu0 0
      %709 = vmatpush1.bf16.msra.mxu0 %v675
      %710 = vmatprep.subr.bf16.mxu0 0
      %711 = vmatpush1.bf16.msra.mxu0 %v676
      %712 = vmatprep.subr.bf16.mxu0 0
      %713 = vmatpush1.bf16.msra.mxu0 %v677
      %714 = vmatprep.subr.bf16.mxu0 0
      %715 = vmatpush1.bf16.msra.mxu0 %v678
      %716 = vmatprep.subr.bf16.mxu0 0
      %717 = vmatpush1.bf16.msra.mxu0 0
      %718 = vmatprep.subr.bf16.mxu0 0
      %719 = vmatpush1.bf16.msra.mxu0 0
      %720 = vmatprep.subr.bf16.mxu0 0
      %721 = vmatpush1.bf16.msra.mxu0 0
      %722 = vmatprep.subr.bf16.mxu0 0
      %723 = vmatpush1.bf16.msra.mxu0 0
      %724 = vmatprep.subr.bf16.mxu0 0
      %725 = vmatpush1.bf16.msra.mxu0 0
      %726 = vmatprep.subr.bf16.mxu0 0
      %727 = vmatpush1.bf16.msra.mxu0 0
      %728 = vmatprep.subr.bf16.mxu0 0
      %729 = vmatpush1.bf16.msra.mxu0 0
      %730 = vmatprep.subr.bf16.mxu0 0
      %731 = vmatpush1.bf16.msra.mxu0 0
      %732 = vmatprep.subr.bf16.mxu0 0
      %733 = vmatpush1.bf16.msra.mxu0 0
      %734 = vmatprep.subr.bf16.mxu0 0
      %735 = vmatpush1.bf16.msra.mxu0 0
      %736 = vmatprep.subr.bf16.mxu0 0
      %737 = vmatpush1.bf16.msra.mxu0 0
      %738 = vmatprep.subr.bf16.mxu0 0
      %739 = vmatpush1.bf16.msra.mxu0 0
      %740 = vmatprep.mubr.bf16.mxu0 0
      %741 = vmatmul.mubr.bf16.gmra.mrb[0].mxu0 %v685
      %v742 = vpop.f32.mrb[0].mxu0
      %v743 = vadd.f32 %v657, %v742
      %v744 = vpop.f32.mrb[0].mxu0
      %v745 = vpop.f32.mrb[0].mxu0
      %v746 = vadd.f32 %v657, %v745
      %v747 = vpop.f32.mrb[0].mxu0
      %748 = vmatprep.mubr.bf16.mxu0 0
      %749 = vmatmul.mubr.bf16.gmra.mrb[0].mxu0 %v688
      %v750 = vpop.f32.mrb[0].mxu0
      %v751 = vadd.f32 %v657, %v750
      %v752 = vpop.f32.mrb[0].mxu0
      %v753 = vpop.f32.mrb[0].mxu0
      %v754 = vadd.f32 %v657, %v753
      %v755 = vpop.f32.mrb[0].mxu0
      %756 = vmatprep.mubr.bf16.mxu0 0
      %757 = vmatmul.mubr.bf16.gmra.mrb[0].mxu0 %v691
      %v758 = vpop.f32.mrb[0].mxu0
      %v759 = vadd.f32 %v657, %v758
      %v760 = vpop.f32.mrb[0].mxu0
      %v761 = vpop.f32.mrb[0].mxu0
      %v762 = vadd.f32 %v657, %v761
      %v763 = vpop.f32.mrb[0].mxu0
      %764 = vmatprep.mubr.bf16.mxu0 0
      %765 = vmatmul.mubr.bf16.gmra.mrb[0].mxu0 %v694
      %v766 = vpop.f32.mrb[0].mxu0
      %v767 = vadd.f32 %v657, %v766
      %v768 = vpop.f32.mrb[0].mxu0
      %v769 = vpop.f32.mrb[0].mxu0
      %v770 = vadd.f32 %v657, %v769
      %v771 = vpop.f32.mrb[0].mxu0
      %772 = vmatprep.mubr.bf16.mxu0 0
      %773 = vmatmul.mubr.bf16.gmra.mrb[0].mxu0 %v697
      %v774 = vpop.f32.mrb[0].mxu0
      %v775 = vadd.f32 %v657, %v774
      %v776 = vpop.f32.mrb[0].mxu0
      %v777 = vpop.f32.mrb[0].mxu0
      %v778 = vadd.f32 %v657, %v777
      %v779 = vpop.f32.mrb[0].mxu0
      %780 = vmatprep.mubr.bf16.mxu0 0
      %781 = vmatmul.mubr.bf16.gmra.mrb[0].mxu0 %v700
      %v782 = vpop.f32.mrb[0].mxu0
      %v783 = vadd.f32 %v657, %v782
      %v784 = vpop.f32.mrb[0].mxu0
      %v785 = vpop.f32.mrb[0].mxu0
      %v786 = vadd.f32 %v657, %v785
      %v787 = vpop.f32.mrb[0].mxu0
      %788 = vmatprep.mubr.bf16.mxu0 0
      %789 = vmatmul.mubr.bf16.gmra.mrb[0].mxu0 %v703
      %v790 = vpop.f32.mrb[0].mxu0
      %v791 = vadd.f32 %v657, %v790
      %v792 = vpop.f32.mrb[0].mxu0
      %v793 = vpop.f32.mrb[0].mxu0
      %v794 = vadd.f32 %v657, %v793
      %v795 = vpop.f32.mrb[0].mxu0
      %796 = vmatprep.mubr.bf16.mxu0 0
      %797 = vmatmul.mubr.bf16.gmra.mrb[0].mxu0 %v706
      %v798 = vpop.f32.mrb[0].mxu0
      %v799 = vadd.f32 %v657, %v798
      %v800 = vpop.f32.mrb[0].mxu0
      %v801 = vpop.f32.mrb[0].mxu0
      %v802 = vadd.f32 %v657, %v801
      %v803 = vpop.f32.mrb[0].mxu0
      %804 = vdwg.mxu0
      %v805 = vmax.f32 %v743, 0.0
      %v806 = vmax.f32 %v746, 0.0
      %v807 = vmax.f32 %v751, 0.0
      %v808 = vmax.f32 %v754, 0.0
      %v809 = vmax.f32 %v759, 0.0
      %v810 = vmax.f32 %v762, 0.0
      %v811 = vmax.f32 %v767, 0.0
      %v812 = vmax.f32 %v770, 0.0
      %v813 = vmax.f32 %v775, 0.0
      %v814 = vmax.f32 %v778, 0.0
      %v815 = vmax.f32 %v783, 0.0
      %v816 = vmax.f32 %v786, 0.0
      %v817 = vmax.f32 %v791, 0.0
      %v818 = vmax.f32 %v794, 0.0
      %v819 = vmax.f32 %v799, 0.0
      %v820 = vmax.f32 %v802, 0.0
      %v821 = vld [vmem:[%s7] sm:$0x1]
      %v823 = vlaneseq
      %v824 = vshrl.u32 %v823, 7
      %v825 = vsub.s32 0, %v824
      %v826 = vrot.slane %v821, %v825
      %v828 = vmul.f32 %v805, %v826
      %v829 = vmul.f32 %v806, %v826
      %v830 = vmul.f32 %v807, %v826
      %v831 = vmul.f32 %v808, %v826
      %v832 = vmul.f32 %v809, %v826
      %v833 = vmul.f32 %v810, %v826
      %v834 = vmul.f32 %v811, %v826
      %v835 = vmul.f32 %v812, %v826
      %v836 = vmul.f32 %v813, %v826
      %v837 = vmul.f32 %v814, %v826
      %v838 = vmul.f32 %v815, %v826
      %v839 = vmul.f32 %v816, %v826
      %v840 = vmul.f32 %v817, %v826
      %v841 = vmul.f32 %v818, %v826
      %v842 = vmul.f32 %v819, %v826
      %v843 = vmul.f32 %v820, %v826
      %v844 = vsel %vm356, %v828, 0.0
      %845 = vadd.xlane.f32.xlu0 %v844
      %v846 = vpop.xlane.xlu0 %845
      %v847 = vsel %vm356, %v829, 0.0
      %848 = vadd.xlane.f32.xlu0 %v847
      %v849 = vpop.xlane.xlu0 %848
      %v850 = vsel %vm356, %v830, 0.0
      %851 = vadd.xlane.f32.xlu0 %v850
      %v852 = vpop.xlane.xlu0 %851
      %v853 = vsel %vm356, %v831, 0.0
      %854 = vadd.xlane.f32.xlu0 %v853
      %v855 = vpop.xlane.xlu0 %854
      %v856 = vsel %vm356, %v832, 0.0
      %857 = vadd.xlane.f32.xlu0 %v856
      %v858 = vpop.xlane.xlu0 %857
      %v859 = vsel %vm356, %v833, 0.0
      %860 = vadd.xlane.f32.xlu0 %v859
      %v861 = vpop.xlane.xlu0 %860
      %v862 = vsel %vm356, %v834, 0.0
      %863 = vadd.xlane.f32.xlu0 %v862
      %v864 = vpop.xlane.xlu0 %863
      %v865 = vsel %vm356, %v835, 0.0
      %866 = vadd.xlane.f32.xlu0 %v865
      %v867 = vpop.xlane.xlu0 %866
      %v868 = vsel %vm356, %v836, 0.0
      %869 = vadd.xlane.f32.xlu0 %v868
      %v870 = vpop.xlane.xlu0 %869
      %v871 = vsel %vm356, %v837, 0.0
      %872 = vadd.xlane.f32.xlu0 %v871
      %v873 = vpop.xlane.xlu0 %872
      %v874 = vsel %vm356, %v838, 0.0
      %875 = vadd.xlane.f32.xlu0 %v874
      %v876 = vpop.xlane.xlu0 %875
      %v877 = vsel %vm356, %v839, 0.0
      %878 = vadd.xlane.f32.xlu0 %v877
      %v879 = vpop.xlane.xlu0 %878
      %v880 = vsel %vm356, %v840, 0.0
      %881 = vadd.xlane.f32.xlu0 %v880
      %v882 = vpop.xlane.xlu0 %881
      %v883 = vsel %vm356, %v841, 0.0
      %884 = vadd.xlane.f32.xlu0 %v883
      %v885 = vpop.xlane.xlu0 %884
      %v886 = vsel %vm356, %v842, 0.0
      %887 = vadd.xlane.f32.xlu0 %v886
      %v888 = vpop.xlane.xlu0 %887
      %v889 = vsel %vm356, %v843, 0.0
      %890 = vadd.xlane.f32.xlu0 %v889
      %v891 = vpop.xlane.xlu0 %890
      %v892 = vld [vmem:[#allocation2] sm:$0x1]
      %v894 = vlaneseq
      %v895 = vshrl.u32 %v894, 7
      %v896 = vsub.s32 0, %v895
      %v897 = vrot.slane %v892, %v896
      %v899 = vadd.f32 %v846, %v897
      %v900 = vadd.f32 %v849, %v897
      %v901 = vadd.f32 %v852, %v897
      %v902 = vadd.f32 %v855, %v897
      %v903 = vadd.f32 %v858, %v897
      %v904 = vadd.f32 %v861, %v897
      %v905 = vadd.f32 %v864, %v897
      %v906 = vadd.f32 %v867, %v897
      %v907 = vadd.f32 %v870, %v897
      %v908 = vadd.f32 %v873, %v897
      %v909 = vadd.f32 %v876, %v897
      %v910 = vadd.f32 %v879, %v897
      %v911 = vadd.f32 %v882, %v897
      %v912 = vadd.f32 %v885, %v897
      %v913 = vadd.f32 %v888, %v897
      %v914 = vadd.f32 %v891, %v897
      %vm915 = vcmask 7168
      %916 = vst.msk [vmem:[%s336] sm:$0xff] %vm915, %v899
      %917 = vst.msk [vmem:[%s336 + $0x8] sm:$0xff] %vm915, %v900
      %918 = vst.msk [vmem:[%s336 + $0x10] sm:$0xff] %vm915, %v901
      %919 = vst.msk [vmem:[%s336 + $0x18] sm:$0xff] %vm915, %v902
      %920 = vst.msk [vmem:[%s336 + $0x20] sm:$0xff] %vm915, %v903
      %921 = vst.msk [vmem:[%s336 + $0x28] sm:$0xff] %vm915, %v904
      %922 = vst.msk [vmem:[%s336 + $0x30] sm:$0xff] %vm915, %v905
      %923 = vst.msk [vmem:[%s336 + $0x38] sm:$0xff] %vm915, %v906
      %924 = vst.msk [vmem:[%s336 + $0x40] sm:$0xff] %vm915, %v907
      %925 = vst.msk [vmem:[%s336 + $0x48] sm:$0xff] %vm915, %v908
      %926 = vst.msk [vmem:[%s336 + $0x50] sm:$0xff] %vm915, %v909
      %927 = vst.msk [vmem:[%s336 + $0x58] sm:$0xff] %vm915, %v910
      %928 = vst.msk [vmem:[%s336 + $0x60] sm:$0xff] %vm915, %v911
      %929 = vst.msk [vmem:[%s336 + $0x68] sm:$0xff] %vm915, %v912
      %930 = vst.msk [vmem:[%s336 + $0x70] sm:$0xff] %vm915, %v913
      %931 = vst.msk [vmem:[%s336 + $0x78] sm:$0xff] %vm915, %v914
      %s932 = smul.u32 16, %s22
      %p933 = scmp.lt.s32.totalorder %s932, 31
      %s934 = scalar_select %p933, %s932, 31
      %s935 = smul.addr %s934, 8
      %s936 = scalar_lea.vmem %s9, %s935
      // Predicated region
      $region57: #{tpu_custom_call.1} parent=55 // pred_check
        %p937 = pneg %p234
      $region58: #{tpu_custom_call.1} parent=55 // pred_check_branch
        %939 = sbr.rel (%p937) target = $region60
      $region59: #{tpu_custom_call.1} parent=55 // pred_region
        %s940 = smul.u32 16, %s22
      $region60: #{tpu_custom_call.1} parent=55 // pred_fallthru
        _
    $region56: #{tpu_custom_call.1} parent=5 // pred_fallthru
      _
    %p941 = scmp.le.s32.totalorder 2, %s17
    // Predicated region
    $region61: #{tpu_custom_call.1} parent=5 // pred_check
      %p942 = pneg %p941
    $region62: #{tpu_custom_call.1} parent=5 // pred_check_branch
      %944 = sbr.rel (%p942) target = $region64
    $region63: #{tpu_custom_call.1} parent=5 // pred_region
      %s945 = ssub.s32 %s17, 2
      // Predicated region
      $region65: #{tpu_custom_call.1} parent=63 // pred_check
        %p946 = pneg %p240
      $region66: #{tpu_custom_call.1} parent=63 // pred_check_branch
        %948 = sbr.rel (%p946) target = $region68
      $region67: #{tpu_custom_call.1} parent=63 // pred_region
        %s949 = smul.u32 16, %s23
        %p950 = scmp.lt.s32.totalorder %s949, 31
        %s951 = scalar_select %p950, %s949, 31
        %s952 = smul.addr %s951, 8
        %s953 = scalar_lea.vmem %s9, %s952
      $region68: #{tpu_custom_call.1} parent=63 // pred_fallthru
        _
    $region64: #{tpu_custom_call.1} parent=5 // pred_fallthru
      _
  $region6: #{tpu_custom_call.1} parent=0 // loop_footer
    %s21 = sadd.s32 1, %s17
  $region7: #{tpu_custom_call.1} parent=0 // loop_footer_branch
    %16 = sbr.rel target = $region3
  $region8: #{tpu_custom_call.1} parent=0 // loop_exit
    _

</llo_original>
